<compile_context>
chip_gen: v7x
topology: tpu7x:2x2x1
jax: 0.10.0
libtpu: 0.0.40
codegen_flags: <defaults>
</compile_context>

<pallas_src>
import functools

import jax
import jax.numpy as jnp
from jax.experimental import pallas as pl
from jax.experimental.pallas import tpu as pltpu

EPS = 1e-6
_MiB = 1024 * 1024


def _at_kernel(s_ref, t_ref, o_ref, am_s_ref, am_t_ref, *, channels, c_chunk):
    """One grid step: TB samples, full C and HW resident in the block.

    s_ref/t_ref : (TB, C, HW) input blocks in their native dtype (lane = HW).
    o_ref       : (1, 1, 128) lane-dense partial sum-of-squared-diffs block.
    am_*_ref    : (TB, HW) f32 VMEM accumulators for the channel reduction.
    """
    am_s_ref[...] = jnp.zeros_like(am_s_ref)
    am_t_ref[...] = jnp.zeros_like(am_t_ref)

    # Chunked channel reduce: bounds the f32 upcast / square temporaries to
    # chunk size instead of the whole DMA tile (keeps v7x's 64 MiB VMEM happy,
    # especially for bf16 inputs where the f32 copy is 2x the tile).
    for c0 in range(0, channels, c_chunk):
        c1 = min(channels, c0 + c_chunk)
        s = s_ref[:, c0:c1, :].astype(jnp.float32)
        t = t_ref[:, c0:c1, :].astype(jnp.float32)
        am_s_ref[...] += jnp.sum(s * s, axis=1)
        am_t_ref[...] += jnp.sum(t * t, axis=1)

    am_s = am_s_ref[...]
    am_t = am_t_ref[...]

    # per-sample Frobenius norm over the spatial (lane) axis -> (TB, 1)
    norm_s = jnp.sqrt(jnp.sum(am_s * am_s, axis=-1, keepdims=True))
    norm_t = jnp.sqrt(jnp.sum(am_t * am_t, axis=-1, keepdims=True))

    # one exact scalar divide per sample, then broadcast multiplies
    # (eps=1e-6 / rtol=1e-5 budget forbids the ~2^-12 approx reciprocal)
    d = am_s * (1.0 / (norm_s + EPS)) - am_t * (1.0 / (norm_t + EPS))
    partial = jnp.sum(d * d)  # scalar f32: this block's sum of squared diffs

    o_ref[...] = jnp.broadcast_to(partial, o_ref.shape)


def _input_spec(tb, c, hw, nbuf):
    idx = lambda i: (i, 0, 0)
    if nbuf > 2:
        try:
            return pl.BlockSpec((tb, c, hw), idx, pipeline_mode=pl.Buffered(nbuf))
        except Exception:
            pass  # older API: fall back to default double-buffering
    return pl.BlockSpec((tb, c, hw), idx)


def at_loss(fm_s, fm_t):
    """Pallas implementation of AT().forward(fm_s, fm_t). Returns scalar f32."""
    assert fm_s.shape == fm_t.shape
    N, C, H, W = fm_s.shape
    HW = H * W
    total_elems = float(N * 1 * H * W)  # MSE 'mean' denominator over (N,1,H,W)

    # Lane-dense layout: (N, C, H, W) -> (N, C, H*W); free metadata reshape for
    # contiguous NCHW, flattened spatial lands on the 128-wide lane axis.
    # TODO(synk): for HW < 128 (7x7/8x8/14x14 maps) fold g = 128 // HW channel
    # groups into the lane axis to recover full DMA lane utilization.
    s2 = fm_s.reshape(N, C, HW)
    t2 = fm_t.reshape(N, C, HW)

    itemsize = fm_s.dtype.itemsize
    bytes_per_sample = C * HW * itemsize

    # --- tiling --------------------------------------------------------------
    # Scoped VMEM: 48 MiB is safe on every generation (v7x has 64 MiB physical)
    # and big enough — past a few MiB per tile there is no HBM-roofline gain.
    vmem_limit = 48 * _MiB
    per_buffer_cap = int(0.6 * vmem_limit) // 4  # 2 tensors x 2 pipeline buffers
    # TODO(synk): a C-tiled reduction grid axis would be needed if one sample
    # ever outgrew the per-buffer budget; not the case for AT feature maps.
    assert bytes_per_sample <= per_buffer_cap, (
        "single sample exceeds VMEM tile budget; needs a C-tiled reduction grid")

    target_tile = 4 * _MiB  # HBM roofline plateaus by ~2-8 MiB tiles
    tb = max(1, min(target_tile, per_buffer_cap) // bytes_per_sample)
    # TC-aware grid: keep >= ~8 steps whenever N allows, so double-buffering has
    # something to prefetch and 'parallel' shards across both v7x TensorCores.
    tb = int(min(tb, max(1, pl.cdiv(N, 8)), N))

    grid = int(pl.cdiv(N, tb))
    n_pad = grid * tb
    if n_pad != N:
        # zero-padded samples contribute exactly 0 to the squared-diff sum
        pad = ((0, n_pad - N), (0, 0), (0, 0))
        s2 = jnp.pad(s2, pad)
        t2 = jnp.pad(t2, pad)

    tile_bytes = tb * bytes_per_sample
    # channel chunk so in-kernel f32 temporaries stay <= ~1 MiB per tensor
    c_chunk = int(max(1, min(C, _MiB // max(tb * HW * 4, 1))))

    # deeper input pipelining when per-step tiles are small (exposed DMA latency)
    nbuf = 3 if (tile_bytes <= 2 * _MiB and grid >= 3) else 2

    kernel = functools.partial(_at_kernel, channels=C, c_chunk=c_chunk)

    cost = pl.CostEstimate(
        flops=int(4 * n_pad * C * HW + 12 * n_pad * HW),
        transcendentals=int(2 * n_pad),
        bytes_accessed=int(2 * n_pad * bytes_per_sample + grid * 128 * 4),
    )

    out = pl.pallas_call(
        kernel,
        out_shape=jax.ShapeDtypeStruct((grid, 1, 128), jnp.float32),
        grid=(grid,),
        in_specs=[_input_spec(tb, C, HW, nbuf), _input_spec(tb, C, HW, nbuf)],
        out_specs=pl.BlockSpec((1, 1, 128), lambda i: (i, 0, 0)),
        scratch_shapes=[pltpu.VMEM((tb, HW), jnp.float32),
                        pltpu.VMEM((tb, HW), jnp.float32)],
        compiler_params=pltpu.CompilerParams(
            dimension_semantics=("parallel",),
            vmem_limit_bytes=int(vmem_limit),
        ),
        cost_estimate=cost,
    )(s2, t2)

    # finish the reduction + mean in f32 in the wrapper (original N, not padded)
    return jnp.sum(out[:, 0, 0]) / total_elems


def at_loss_ref(fm_s, fm_t):
    """Pure-JAX reference mirroring the PyTorch module."""
    def attention_map(fm):
        am = jnp.sum(jnp.abs(fm.astype(jnp.float32)) ** 2, axis=1, keepdims=True)
        norm = jnp.sqrt(jnp.sum(am * am, axis=(2, 3), keepdims=True))
        return am / (norm + EPS)

    a_s = attention_map(fm_s)
    a_t = attention_map(fm_t)
    return jnp.mean((a_s - a_t) ** 2)


if __name__ == "__main__":
    # Small deterministic inputs: N=2, C=4, H=W=16 (student/teacher feature maps)
    key = jax.random.PRNGKey(0)
    k_s, k_t = jax.random.split(key)
    fm_s = jax.random.normal(k_s, (2, 4, 16, 16), dtype=jnp.float32)
    fm_t = jax.random.normal(k_t, (2, 4, 16, 16), dtype=jnp.float32)

    loss = jax.block_until_ready(at_loss(fm_s, fm_t))
    ref = jax.block_until_ready(at_loss_ref(fm_s, fm_t))
    assert jnp.allclose(loss, ref, rtol=1e-5, atol=1e-6), (loss, ref)

    # Exercise the zero-padded, multi-sample-per-step, deeper-pipeline path.
    k_s2, k_t2 = jax.random.split(jax.random.PRNGKey(1))
    fm_s2 = jax.random.normal(k_s2, (9, 4, 16, 16), dtype=jnp.float32)
    fm_t2 = jax.random.normal(k_t2, (9, 4, 16, 16), dtype=jnp.float32)
    loss2 = jax.block_until_ready(at_loss(fm_s2, fm_t2))
    ref2 = jax.block_until_ready(at_loss_ref(fm_s2, fm_t2))
    assert jnp.allclose(loss2, ref2, rtol=1e-5, atol=1e-6), (loss2, ref2)

    print("KERNEL_OK")
</pallas_src>

<mosaic_0001>
module attributes {stable_mosaic.version = 11 : i64} {
  func.func @_at_kernel(%arg0: i32, %arg1: memref<1x4x256xf32, #tpu.memory_space<vmem>>, %arg2: memref<1x4x256xf32, #tpu.memory_space<vmem>>, %arg3: memref<1x1x128xf32, #tpu.memory_space<vmem>>, %arg4: memref<1x256xf32, #tpu.memory_space<vmem>>, %arg5: memref<1x256xf32, #tpu.memory_space<vmem>>) attributes {dimension_semantics = [#tpu.dimension_semantics<parallel>], iteration_bounds = array<i64: 2>, scalar_prefetch = 0 : i64, scratch_operands = 2 : i64, tpu.core_type = #tpu.core_type<tc>, window_params = [{transform_indices = @transform_0, window_bounds = array<i64: 1, 4, 256>}, {transform_indices = @transform_1, window_bounds = array<i64: 1, 4, 256>}, {transform_indices = @transform_2, window_bounds = array<i64: 1, 1, 128>}]} {
    %cst = arith.constant 0.000000e+00 : f32
    %0 = vector.broadcast %cst : f32 to vector<1x256xf32>
    %c0 = arith.constant 0 : index
    %c0_0 = arith.constant 0 : index
    %1 = vector.load %arg4[%c0, %c0_0] : memref<1x256xf32, #tpu.memory_space<vmem>>, vector<1x256xf32>
    tpu.vector_store %arg4[%c0, %c0_0], %0 {strides = array<i32>} : memref<1x256xf32, #tpu.memory_space<vmem>>, vector<1x256xf32>,
    %cst_1 = arith.constant 0.000000e+00 : f32
    %2 = vector.broadcast %cst_1 : f32 to vector<1x256xf32>
    %c0_2 = arith.constant 0 : index
    %c0_3 = arith.constant 0 : index
    %3 = vector.load %arg5[%c0_2, %c0_3] : memref<1x256xf32, #tpu.memory_space<vmem>>, vector<1x256xf32>
    tpu.vector_store %arg5[%c0_2, %c0_3], %2 {strides = array<i32>} : memref<1x256xf32, #tpu.memory_space<vmem>>, vector<1x256xf32>,
    %c0_4 = arith.constant 0 : index
    %c0_5 = arith.constant 0 : index
    %c0_6 = arith.constant 0 : index
    %4 = vector.load %arg1[%c0_4, %c0_5, %c0_6] : memref<1x4x256xf32, #tpu.memory_space<vmem>>, vector<1x4x256xf32>
    %c0_7 = arith.constant 0 : index
    %c0_8 = arith.constant 0 : index
    %c0_9 = arith.constant 0 : index
    %5 = vector.load %arg2[%c0_7, %c0_8, %c0_9] : memref<1x4x256xf32, #tpu.memory_space<vmem>>, vector<1x4x256xf32>
    %c0_10 = arith.constant 0 : index
    %c0_11 = arith.constant 0 : index
    %6 = vector.load %arg4[%c0_10, %c0_11] : memref<1x256xf32, #tpu.memory_space<vmem>>, vector<1x256xf32>
    %7 = arith.mulf %4, %4 : vector<1x4x256xf32>
    %cst_12 = arith.constant dense<0.000000e+00> : vector<1x256xf32>
    %8 = vector.multi_reduction <add>, %7, %cst_12 [1] : vector<1x4x256xf32> to vector<1x256xf32>
    %9 = arith.addf %6, %8 : vector<1x256xf32>
    %c0_13 = arith.constant 0 : index
    %c0_14 = arith.constant 0 : index
    %10 = vector.load %arg4[%c0_13, %c0_14] : memref<1x256xf32, #tpu.memory_space<vmem>>, vector<1x256xf32>
    tpu.vector_store %arg4[%c0_13, %c0_14], %9 {strides = array<i32>} : memref<1x256xf32, #tpu.memory_space<vmem>>, vector<1x256xf32>,
    %c0_15 = arith.constant 0 : index
    %c0_16 = arith.constant 0 : index
    %11 = vector.load %arg5[%c0_15, %c0_16] : memref<1x256xf32, #tpu.memory_space<vmem>>, vector<1x256xf32>
    %12 = arith.mulf %5, %5 : vector<1x4x256xf32>
    %cst_17 = arith.constant dense<0.000000e+00> : vector<1x256xf32>
    %13 = vector.multi_reduction <add>, %12, %cst_17 [1] : vector<1x4x256xf32> to vector<1x256xf32>
    %14 = arith.addf %11, %13 : vector<1x256xf32>
    %c0_18 = arith.constant 0 : index
    %c0_19 = arith.constant 0 : index
    %15 = vector.load %arg5[%c0_18, %c0_19] : memref<1x256xf32, #tpu.memory_space<vmem>>, vector<1x256xf32>
    tpu.vector_store %arg5[%c0_18, %c0_19], %14 {strides = array<i32>} : memref<1x256xf32, #tpu.memory_space<vmem>>, vector<1x256xf32>,
    %c0_20 = arith.constant 0 : index
    %c0_21 = arith.constant 0 : index
    %16 = vector.load %arg4[%c0_20, %c0_21] : memref<1x256xf32, #tpu.memory_space<vmem>>, vector<1x256xf32>
    %c0_22 = arith.constant 0 : index
    %c0_23 = arith.constant 0 : index
    %17 = vector.load %arg5[%c0_22, %c0_23] : memref<1x256xf32, #tpu.memory_space<vmem>>, vector<1x256xf32>
    %18 = arith.mulf %16, %16 : vector<1x256xf32>
    %cst_24 = arith.constant dense<0.000000e+00> : vector<1xf32>
    %19 = vector.multi_reduction <add>, %18, %cst_24 [1] : vector<1x256xf32> to vector<1xf32>
    %20 = vector.shape_cast %19 : vector<1xf32> to vector<1x1xf32>
    %21 = math.sqrt %20 : vector<1x1xf32>
    %22 = arith.mulf %17, %17 : vector<1x256xf32>
    %cst_25 = arith.constant dense<0.000000e+00> : vector<1xf32>
    %23 = vector.multi_reduction <add>, %22, %cst_25 [1] : vector<1x256xf32> to vector<1xf32>
    %24 = vector.shape_cast %23 : vector<1xf32> to vector<1x1xf32>
    %25 = math.sqrt %24 : vector<1x1xf32>
    %cst_26 = arith.constant 9.99999997E-7 : f32
    %26 = vector.broadcast %cst_26 : f32 to vector<1x1xf32>
    %27 = arith.addf %21, %26 : vector<1x1xf32>
    %cst_27 = arith.constant 1.000000e+00 : f32
    %28 = vector.broadcast %cst_27 : f32 to vector<1x1xf32>
    %29 = arith.divf %28, %27 : vector<1x1xf32>
    %30 = vector.broadcast %29 : vector<1x1xf32> to vector<1x256xf32>
    %31 = arith.mulf %16, %30 : vector<1x256xf32>
    %cst_28 = arith.constant 9.99999997E-7 : f32
    %32 = vector.broadcast %cst_28 : f32 to vector<1x1xf32>
    %33 = arith.addf %25, %32 : vector<1x1xf32>
    %cst_29 = arith.constant 1.000000e+00 : f32
    %34 = vector.broadcast %cst_29 : f32 to vector<1x1xf32>
    %35 = arith.divf %34, %33 : vector<1x1xf32>
    %36 = vector.broadcast %35 : vector<1x1xf32> to vector<1x256xf32>
    %37 = arith.mulf %17, %36 : vector<1x256xf32>
    %38 = arith.subf %31, %37 : vector<1x256xf32>
    %39 = arith.mulf %38, %38 : vector<1x256xf32>
    %40 = vector.shape_cast %39 : vector<1x256xf32> to vector<1x1x256xf32>
    %cst_30 = arith.constant dense<0.000000e+00> : vector<1xf32>
    %41 = vector.multi_reduction <add>, %40, %cst_30 [1, 2] : vector<1x1x256xf32> to vector<1xf32>
    %42 = vector.shape_cast %41 : vector<1xf32> to vector<1x1x1xf32>
    %43 = vector.extract %42[0, 0, 0] : f32 from vector<1x1x1xf32>
    %44 = vector.broadcast %43 : f32 to vector<1x1x128xf32>
    %c0_31 = arith.constant 0 : index
    %c0_32 = arith.constant 0 : index
    %c0_33 = arith.constant 0 : index
    %45 = vector.load %arg3[%c0_31, %c0_32, %c0_33] : memref<1x1x128xf32, #tpu.memory_space<vmem>>, vector<1x1x128xf32>
    tpu.vector_store %arg3[%c0_31, %c0_32, %c0_33], %44 {strides = array<i32>} : memref<1x1x128xf32, #tpu.memory_space<vmem>>, vector<1x1x128xf32>,
    return
  }
  func.func @transform_0(%arg0: i32) -> (i32, i32, i32) {
    %c0_i32 = arith.constant 0 : i32
    %c0_i32_0 = arith.constant 0 : i32
    %c0_i32_1 = arith.constant 0 : i32
    return %arg0, %c0_i32, %c0_i32_0 : i32, i32, i32
  }
  func.func @transform_1(%arg0: i32) -> (i32, i32, i32) {
    %c0_i32 = arith.constant 0 : i32
    %c0_i32_0 = arith.constant 0 : i32
    %c0_i32_1 = arith.constant 0 : i32
    return %arg0, %c0_i32, %c0_i32_0 : i32, i32, i32
  }
  func.func @transform_2(%arg0: i32) -> (i32, i32, i32) {
    %c0_i32 = arith.constant 0 : i32
    %c0_i32_0 = arith.constant 0 : i32
    %c0_i32_1 = arith.constant 0 : i32
    return %arg0, %c0_i32, %c0_i32_0 : i32, i32, i32
  }
}

</mosaic_0001>

<llo_original>
// kernel: tpu_custom_call.1
$region0: #{tpu_custom_call.1}
  #allocation0 [shape = 'u32[]', space=smem, size = 0x4, offset = 0x4, fixed_abs, tag = 'smem constant byte address 0x4 - core index']
  #allocation1 [shape = 'u32[144,128]{1,0:T(1,128)}', space=vmem, size = 0x12000, scoped, tag = 'internal scratch']
  #allocation2 [shape = 'f32[1,256]{1,0:T(1,128)}', space=vmem, size = 0x400, scoped, tag = 'scratch operand']
  #allocation3 [shape = 'f32[1,256]{1,0:T(1,128)}', space=vmem, size = 0x400, scoped, tag = 'scratch operand']
  %s0 = inlined_call_operand.hbm [shape: f32[2,4,256], index: 0, kind: input, shape index: {}]
  %s1 = inlined_call_operand.hbm [shape: f32[2,4,256], index: 1, kind: input, shape index: {}]
  %s2 = inlined_call_operand.hbm [shape: f32[2,1,128], index: 2, kind: output, shape index: {}]
  %s3 = sld [smem:[#allocation0]]
  $region49: #{tpu_custom_call.1} parent=0
    _
  %s5 = ssub.s32 1, %s3
  %s6 = scalar_select 0, %s5, %s3
  $region1: #{tpu_custom_call.1} parent=0
    #allocation4 [shape = 'u8[8192]{0}', space=vmem, size = 0x2000, scoped, tag = 'input window, operand 0']
    #allocation5 [shape = 's32[2]{0}', space=sflag, size = 0x8, scoped, tag = 'scoped memory for tpu_custom_call.1']
    #allocation6 [shape = 's32[2]{0}', space=sflag, size = 0x8, scoped, tag = 'scoped memory for tpu_custom_call.1']
    #allocation7 [shape = 'u8[8192]{0}', space=vmem, size = 0x2000, scoped, tag = 'input window, operand 1']
    #allocation8 [shape = 's32[2]{0}', space=sflag, size = 0x8, scoped, tag = 'scoped memory for tpu_custom_call.1']
    #allocation9 [shape = 'u8[1024]{0}', space=vmem, size = 0x400, scoped, tag = 'output window, operand 0']
    %7 = vsyncpa [#allocation5], 0
    %s8 = scalar_lea.sflag [#allocation5], 1
    %9 = vsyncpa %s8, 0
    %10 = vsyncpa [#allocation8], 0
    %s11 = scalar_lea.sflag [#allocation8], 1
    %12 = vsyncpa %s11, 0
    %13 = vsyncpa [#allocation6], 0
    %s14 = scalar_lea.sflag [#allocation6], 1
    %15 = vsyncpa %s14, 0
    loop: start=0, step=1, limit=4
    $region2: #{tpu_custom_call.1} parent=1 // loop_pre_header
      _
    $region3: #{tpu_custom_call.1} parent=1 // loop_header
      %s17 = sphi 0, %s21
      %p18 = scmp.ge.s32.totalorder %s17, 4
      %s27 = sphi 0, %s29
      %s30 = sphi 0, %s27
      %s31 = sphi 0, %s30
      %s47 = sphi 0, %s31
      %s53 = sphi 0, %s55
      %s56 = sphi 0, %s53
      %s57 = sphi 0, %s56
      %s73 = sphi 0, %s57
      %s79 = sphi 0, %s81
      %s82 = sphi 0, %s79
      %s83 = sphi 0, %s82
      %s99 = sphi 0, %s83
    $region4: #{tpu_custom_call.1} parent=1 // loop_header_branch
      %20 = sbr.rel (%p18) target = $region8
    $region5: #{tpu_custom_call.1} parent=1 // loop_body
      %s22 = ssub.s32 %s17, 1
      %s23 = ssub.s32 %s17, 2
      %s24 = sadd.s32 %s17, 1
      %s25 = ssub.s32 %s17, %s24
      %p26 = scmp.eq.s32.totalorder %s25, 0
      %s28 = sadd.s32 %s27, 1
      %s29 = scalar_select %p26, %s27, %s28
      %p32 = pneg %p26
      %p33 = scmp.eq.s32.totalorder %s17, 1
      %p34 = por %p32, %p33
      %p35 = scmp.ne.s32.totalorder %s27, %s30
      %p36 = scmp.eq.s32.totalorder %s17, 0
      %p37 = por %p35, %p36
      %p38 = scmp.ne.s32.totalorder %s27, %s30
      %p39 = scmp.eq.s32.totalorder %s22, 1
      %p40 = por %p38, %p39
      %p41 = scmp.ne.s32.totalorder %s30, %s31
      %p42 = scmp.eq.s32.totalorder %s22, 0
      %p43 = por %p41, %p42
      %p44 = scmp.ne.s32.totalorder %s30, %s31
      %p45 = scmp.eq.s32.totalorder %s23, 1
      %p46 = por %p44, %p45
      %p48 = scmp.ne.s32.totalorder %s31, %s47
      %p49 = scmp.eq.s32.totalorder %s23, 0
      %p50 = por %p48, %p49
      %s51 = ssub.s32 %s17, %s24
      %p52 = scmp.eq.s32.totalorder %s51, 0
      %s54 = sadd.s32 %s53, 1
      %s55 = scalar_select %p52, %s53, %s54
      %p58 = pneg %p52
      %p59 = scmp.eq.s32.totalorder %s17, 1
      %p60 = por %p58, %p59
      %p61 = scmp.ne.s32.totalorder %s53, %s56
      %p62 = scmp.eq.s32.totalorder %s17, 0
      %p63 = por %p61, %p62
      %p64 = scmp.ne.s32.totalorder %s53, %s56
      %p65 = scmp.eq.s32.totalorder %s22, 1
      %p66 = por %p64, %p65
      %p67 = scmp.ne.s32.totalorder %s56, %s57
      %p68 = scmp.eq.s32.totalorder %s22, 0
      %p69 = por %p67, %p68
      %p70 = scmp.ne.s32.totalorder %s56, %s57
      %p71 = scmp.eq.s32.totalorder %s23, 1
      %p72 = por %p70, %p71
      %p74 = scmp.ne.s32.totalorder %s57, %s73
      %p75 = scmp.eq.s32.totalorder %s23, 0
      %p76 = por %p74, %p75
      %s77 = ssub.s32 %s17, %s24
      %p78 = scmp.eq.s32.totalorder %s77, 0
      %s80 = sadd.s32 %s79, 1
      %s81 = scalar_select %p78, %s79, %s80
      %p84 = pneg %p78
      %p85 = scmp.eq.s32.totalorder %s17, 1
      %p86 = por %p84, %p85
      %p87 = scmp.ne.s32.totalorder %s79, %s82
      %p88 = scmp.eq.s32.totalorder %s17, 0
      %p89 = por %p87, %p88
      %p90 = scmp.ne.s32.totalorder %s79, %s82
      %p91 = scmp.eq.s32.totalorder %s22, 1
      %p92 = por %p90, %p91
      %p93 = scmp.ne.s32.totalorder %s82, %s83
      %p94 = scmp.eq.s32.totalorder %s22, 0
      %p95 = por %p93, %p94
      %p96 = scmp.ne.s32.totalorder %s82, %s83
      %p97 = scmp.eq.s32.totalorder %s23, 1
      %p98 = por %p96, %p97
      %p100 = scmp.ne.s32.totalorder %s83, %s99
      %p101 = scmp.eq.s32.totalorder %s23, 0
      %p102 = por %p100, %p101
      %p103 = scmp.le.s32.totalorder 1, %s17
      %p104 = scmp.lt.s32.totalorder %s17, 3
      %p105 = pnand %p103, %p104
      %p106 = pneg %p105
      // Predicated region
      $region9: #{tpu_custom_call.1} parent=5 // pred_check
        _
      $region10: #{tpu_custom_call.1} parent=5 // pred_check_branch
        %108 = sbr.rel (%p105) target = $region12
      $region11: #{tpu_custom_call.1} parent=5 // pred_region
        %s109 = ssub.s32 %s17, 1
      $region12: #{tpu_custom_call.1} parent=5 // pred_fallthru
        _
      %p110 = scmp.lt.s32.totalorder %s17, 2
      // Predicated region
      $region13: #{tpu_custom_call.1} parent=5 // pred_check
        %p111 = pneg %p110
      $region14: #{tpu_custom_call.1} parent=5 // pred_check_branch
        %113 = sbr.rel (%p111) target = $region16
      $region15: #{tpu_custom_call.1} parent=5 // pred_region
        // Predicated region
        $region17: #{tpu_custom_call.1} parent=15 // pred_check
          %p114 = pneg %p37
        $region18: #{tpu_custom_call.1} parent=15 // pred_check_branch
          %116 = sbr.rel (%p114) target = $region20
        $region19: #{tpu_custom_call.1} parent=15 // pred_region
          %s117 = sand.u32 %s27, 1
          %s118 = scalar_lea.sflag [#allocation5], %s117
          %s119 = sand.u32 %s27, 1
          %s120 = smul.addr %s119, 8
          %s121 = scalar_lea.vmem [#allocation4], %s120
          %s123 = ssub.s32 128, 128
          %124 = vsyncadd %s118, %s123
          %s125 = smul.addr %s17, 2
          %s126 = smul.addr %s125, 64
          %s127 = scalar_lea.hbm %s0, %s126
          %s129 = sshll.u32 %s121, 4
          %s130 = int_to_ptr.vmem [resolvable:$true] %s129
          %132 = dma.hbm_to_vmem [thread:$0]  %s127, 128, %s130, %s118
        $region20: #{tpu_custom_call.1} parent=15 // pred_fallthru
          _
        // Predicated region
        $region21: #{tpu_custom_call.1} parent=15 // pred_check
          %p133 = pneg %p63
        $region22: #{tpu_custom_call.1} parent=15 // pred_check_branch
          %135 = sbr.rel (%p133) target = $region24
        $region23: #{tpu_custom_call.1} parent=15 // pred_region
          %s136 = sand.u32 %s53, 1
          %s137 = scalar_lea.sflag [#allocation8], %s136
          %s138 = sand.u32 %s53, 1
          %s139 = smul.addr %s138, 8
          %s140 = scalar_lea.vmem [#allocation7], %s139
          %s142 = ssub.s32 128, 128
          %143 = vsyncadd %s137, %s142
          %s144 = smul.addr %s17, 2
          %s145 = smul.addr %s144, 64
          %s146 = scalar_lea.hbm %s1, %s145
          %s148 = sshll.u32 %s140, 4
          %s149 = int_to_ptr.vmem [resolvable:$true] %s148
          %151 = dma.hbm_to_vmem [thread:$0]  %s146, 128, %s149, %s137
        $region24: #{tpu_custom_call.1} parent=15 // pred_fallthru
          _
      $region16: #{tpu_custom_call.1} parent=5 // pred_fallthru
        _
      %p152 = scmp.le.s32.totalorder 1, %s17
      %p153 = scmp.lt.s32.totalorder %s17, 3
      %p154 = pnand %p152, %p153
      %p155 = pneg %p154
      // Predicated region
      $region25: #{tpu_custom_call.1} parent=5 // pred_check
        _
      $region26: #{tpu_custom_call.1} parent=5 // pred_check_branch
        %157 = sbr.rel (%p154) target = $region28
      $region27: #{tpu_custom_call.1} parent=5 // pred_region
        %s158 = ssub.s32 %s17, 1
        %s159 = sand.u32 %s30, 1
        %s160 = scalar_lea.sflag [#allocation5], %s159
        %s161 = sand.u32 %s30, 1
        %s162 = smul.addr %s161, 8
        %s163 = scalar_lea.vmem [#allocation4], %s162
        // Predicated region
        $region29: #{tpu_custom_call.1} parent=27 // pred_check
          %p164 = pneg %p43
        $region30: #{tpu_custom_call.1} parent=27 // pred_check_branch
          %166 = sbr.rel (%p164) target = $region32
        $region31: #{tpu_custom_call.1} parent=27 // pred_region
          %167 = dma.done %s160, 128
        $region32: #{tpu_custom_call.1} parent=27 // pred_fallthru
          _
        %s168 = sand.u32 %s56, 1
        %s169 = scalar_lea.sflag [#allocation8], %s168
        %s170 = sand.u32 %s56, 1
        %s171 = smul.addr %s170, 8
        %s172 = scalar_lea.vmem [#allocation7], %s171
        // Predicated region
        $region33: #{tpu_custom_call.1} parent=27 // pred_check
          %p173 = pneg %p69
        $region34: #{tpu_custom_call.1} parent=27 // pred_check_branch
          %175 = sbr.rel (%p173) target = $region36
        $region35: #{tpu_custom_call.1} parent=27 // pred_region
          %176 = dma.done %s169, 128
        $region36: #{tpu_custom_call.1} parent=27 // pred_fallthru
          _
        %s177 = sand.u32 %s30, 1
        %s178 = scalar_lea.sflag [#allocation5], %s177
        %s179 = sand.u32 %s30, 1
        %s180 = smul.addr %s179, 8
        %s181 = scalar_lea.vmem [#allocation4], %s180
        %p182 = pneg %p43
        %p183 = pneg %p40
        %s184 = sand.u32 %s56, 1
        %s185 = scalar_lea.sflag [#allocation8], %s184
        %s186 = sand.u32 %s56, 1
        %s187 = smul.addr %s186, 8
        %s188 = scalar_lea.vmem [#allocation7], %s187
        %p189 = pneg %p69
        %p190 = pneg %p66
        %p191 = pneg %p95
        %p192 = pneg %p92
        %s193 = sand.u32 %s82, 1
        %s194 = scalar_lea.sflag [#allocation6], %s193
        %s195 = sand.u32 %s82, 1
        %s196 = scalar_lea.vmem [#allocation9], %s195
        %v197 = vlaneseq
        %vm198 = vcmp.ge.s32.totalorder %v197, 0
        %vm199 = vcmp.lt.s32.totalorder %v197, 256
        %vm200 = vmand %vm198, %vm199
        %201 = vst.msk [vmem:[#allocation2] sm:$0x3] %vm200, 0.0
        %202 = vst.msk [vmem:[#allocation3] sm:$0x3] %vm200, 0.0
        %v203 = vld [vmem:[%s163] sm:$0xff]
        %v204 = vld [vmem:[%s172] sm:$0xff]
        %v205 = vld [vmem:[#allocation2] sm:$0x3]
        %v206 = vmul.f32 %v203, %v203
        %v208 = vcombine.high %v206, %v206
        %vm210 = vcmask 1043456
        %v211 = vsel %vm210, %v206, 0.0
        %v212 = vrot.slane %v211, 4
        %v213 = vadd.f32 %v211, %v212
        %v214 = vrot.slane %v213, 2
        %v215 = vadd.f32 %v213, %v214
        %v216 = vrot.slane %v215, 1
        %v217 = vadd.f32 %v215, %v216
        %v218 = vsel %vm210, %v208, 0.0
        %v219 = vrot.slane %v218, 4
        %v220 = vadd.f32 %v218, %v219
        %v221 = vrot.slane %v220, 2
        %v222 = vadd.f32 %v220, %v221
        %v223 = vrot.slane %v222, 1
        %v224 = vadd.f32 %v222, %v223
        %v227 = vcombine.low %v217, %v224
        %v229 = vunpack.c.l.s4 1966171168
        %v230 = vunpack.c.0.s8 %v229
        %v231 = vlaneseq
        %v232 = vshrl.u32 %v231, 7
        %v233 = vsub.s32 %v230, %v232
        %v234 = vrot.slane %v227, %v233
        %v236 = vunpack.c.l.s4 1966171168
        %v237 = vunpack.c.0.s8 %v236
        %v238 = vlaneseq
        %v239 = vshrl.u32 %v238, 7
        %v240 = vsub.s32 %v237, %v239
        %v241 = vrot.slane %v234, %v240
        %v243 = vadd.f32 %v205, %v241
        %244 = vst.msk [vmem:[#allocation2] sm:$0x3] %vm200, %v243
        %v245 = vld [vmem:[#allocation3] sm:$0x3]
        %v246 = vmul.f32 %v204, %v204
        %v248 = vcombine.high %v246, %v246
        %v250 = vsel %vm210, %v246, 0.0
        %v251 = vrot.slane %v250, 4
        %v252 = vadd.f32 %v250, %v251
        %v253 = vrot.slane %v252, 2
        %v254 = vadd.f32 %v252, %v253
        %v255 = vrot.slane %v254, 1
        %v256 = vadd.f32 %v254, %v255
        %v257 = vsel %vm210, %v248, 0.0
        %v258 = vrot.slane %v257, 4
        %v259 = vadd.f32 %v257, %v258
        %v260 = vrot.slane %v259, 2
        %v261 = vadd.f32 %v259, %v260
        %v262 = vrot.slane %v261, 1
        %v263 = vadd.f32 %v261, %v262
        %v266 = vcombine.low %v256, %v263
        %v268 = vunpack.c.l.s4 1966171168
        %v269 = vunpack.c.0.s8 %v268
        %v270 = vlaneseq
        %v271 = vshrl.u32 %v270, 7
        %v272 = vsub.s32 %v269, %v271
        %v273 = vrot.slane %v266, %v272
        %v275 = vunpack.c.l.s4 1966171168
        %v276 = vunpack.c.0.s8 %v275
        %v277 = vlaneseq
        %v278 = vshrl.u32 %v277, 7
        %v279 = vsub.s32 %v276, %v278
        %v280 = vrot.slane %v273, %v279
        %v282 = vadd.f32 %v245, %v280
        %283 = vst.msk [vmem:[#allocation3] sm:$0x3] %vm200, %v282
        %v284 = vld [vmem:[#allocation2] sm:$0x3]
        %v285 = vld [vmem:[#allocation3] sm:$0x3]
        %v286 = vmul.f32 %v284, %v284
        %v288 = vlaneseq
        %v289 = vshrl.u32 %v288, 7
        %v290 = vsub.s32 0, %v289
        %v291 = vrot.slane %v286, %v290
        %v292 = vlaneseq
        %v293 = vshrl.u32 %v292, 7
        %v294 = vsub.s32 1, %v293
        %v295 = vrot.slane %v286, %v294
        %vm298 = vcmask 1040384
        %v299 = vsel %vm298, %v291, 0.0
        %v300 = vsel %vm298, %v295, 0.0
        %v301 = vadd.f32 %v299, %v300
        %302 = vadd.xlane.f32.xlu0 %v301
        %v303 = vpop.xlane.xlu0 %302
        %v304 = vrsqrt.pop %v303
        %v305 = vmul.f32 %v303, %v304
        %vm306 = vcmp.eq.f32.partialorder %v303, inf
        %v307 = vsel %vm306, %v303, %v305
        %vm308 = vcmp.eq.f32.partialorder %v303, 0.0
        %v309 = vand.u32 %v303, 2147483648
        %v310 = vsel %vm308, %v309, %v307
        %v311 = vmul.f32 %v285, %v285
        %v313 = vlaneseq
        %v314 = vshrl.u32 %v313, 7
        %v315 = vsub.s32 0, %v314
        %v316 = vrot.slane %v311, %v315
        %v317 = vlaneseq
        %v318 = vshrl.u32 %v317, 7
        %v319 = vsub.s32 1, %v318
        %v320 = vrot.slane %v311, %v319
        %v323 = vsel %vm298, %v316, 0.0
        %v324 = vsel %vm298, %v320, 0.0
        %v325 = vadd.f32 %v323, %v324
        %326 = vadd.xlane.f32.xlu0 %v325
        %v327 = vpop.xlane.xlu0 %326
        %v328 = vrsqrt.pop %v327
        %v329 = vmul.f32 %v327, %v328
        %vm330 = vcmp.eq.f32.partialorder %v327, inf
        %v331 = vsel %vm330, %v327, %v329
        %vm332 = vcmp.eq.f32.partialorder %v327, 0.0
        %v333 = vand.u32 %v327, 2147483648
        %v334 = vsel %vm332, %v333, %v331
        %v335 = vadd.f32 %v310, 1e-06
        %v336 = vrcp.pop %v335
        %v337 = vmul.f32 1.0, %v336
        %v339 = vlaneseq
        %v340 = vshrl.u32 %v339, 7
        %v341 = vsub.s32 0, %v340
        %v342 = vrot.slane %v337, %v341
        %v344 = vmul.f32 %v284, %v342
        %v345 = vadd.f32 %v334, 1e-06
        %v346 = vrcp.pop %v345
        %v347 = vmul.f32 1.0, %v346
        %v349 = vlaneseq
        %v350 = vshrl.u32 %v349, 7
        %v351 = vsub.s32 0, %v350
        %v352 = vrot.slane %v347, %v351
        %v354 = vmul.f32 %v285, %v352
        %v355 = vsub.f32 %v344, %v354
        %v356 = vmul.f32 %v355, %v355
        %v358 = vlaneseq
        %v359 = vshrl.u32 %v358, 7
        %v360 = vsub.s32 0, %v359
        %v361 = vrot.slane %v356, %v360
        %v362 = vlaneseq
        %v363 = vshrl.u32 %v362, 7
        %v364 = vsub.s32 1, %v363
        %v365 = vrot.slane %v356, %v364
        %v368 = vsel %vm298, %v361, 0.0
        %v369 = vsel %vm298, %v365, 0.0
        %v370 = vadd.f32 %v368, %v369
        %371 = vadd.xlane.f32.xlu0 %v370
        %v372 = vpop.xlane.xlu0 %371
        %v373 = vrot.slane %v372, 4
        %v374 = vadd.f32 %v372, %v373
        %v375 = vrot.slane %v374, 2
        %v376 = vadd.f32 %v374, %v375
        %v377 = vrot.slane %v376, 1
        %v378 = vadd.f32 %v376, %v377
        %s379 = vtos %v378
        %v380 = vstv %s379
        %381 = vst [vmem:[%s196] sm:$0x1] %v380
        %s382 = sand.u32 %s82, 1
        %s383 = scalar_lea.sflag [#allocation6], %s382
        %s384 = sand.u32 %s82, 1
        %s385 = scalar_lea.vmem [#allocation9], %s384
        // Predicated region
        $region37: #{tpu_custom_call.1} parent=27 // pred_check
          %p386 = pneg %p92
        $region38: #{tpu_custom_call.1} parent=27 // pred_check_branch
          %388 = sbr.rel (%p386) target = $region40
        $region39: #{tpu_custom_call.1} parent=27 // pred_region
          %s390 = ssub.s32 16, 16
          %391 = vsyncadd %s383, %s390
          %s392 = smul.addr %s22, 16
          %s393 = scalar_lea.hbm %s2, %s392
          %s395 = sshll.u32 %s385, 4
          %s396 = int_to_ptr.vmem [resolvable:$true] %s395
          %398 = dma.vmem_to_hbm [thread:$0]  %s396, 16, %s393, %s383
        $region40: #{tpu_custom_call.1} parent=27 // pred_fallthru
          _
      $region28: #{tpu_custom_call.1} parent=5 // pred_fallthru
        _
      %p399 = scmp.le.s32.totalorder 2, %s17
      // Predicated region
      $region41: #{tpu_custom_call.1} parent=5 // pred_check
        %p400 = pneg %p399
      $region42: #{tpu_custom_call.1} parent=5 // pred_check_branch
        %402 = sbr.rel (%p400) target = $region44
      $region43: #{tpu_custom_call.1} parent=5 // pred_region
        %s403 = ssub.s32 %s17, 2
        // Predicated region
        $region45: #{tpu_custom_call.1} parent=43 // pred_check
          %p404 = pneg %p98
        $region46: #{tpu_custom_call.1} parent=43 // pred_check_branch
          %406 = sbr.rel (%p404) target = $region48
        $region47: #{tpu_custom_call.1} parent=43 // pred_region
          %s407 = sand.u32 %s83, 1
          %s408 = scalar_lea.sflag [#allocation6], %s407
          %s409 = sand.u32 %s83, 1
          %s410 = scalar_lea.vmem [#allocation9], %s409
          %411 = dma.done %s408, 16
        $region48: #{tpu_custom_call.1} parent=43 // pred_fallthru
          _
      $region44: #{tpu_custom_call.1} parent=5 // pred_fallthru
        _
    $region6: #{tpu_custom_call.1} parent=1 // loop_footer
      %s21 = sadd.s32 1, %s17
    $region7: #{tpu_custom_call.1} parent=1 // loop_footer_branch
      %16 = sbr.rel target = $region3
    $region8: #{tpu_custom_call.1} parent=1 // loop_exit
      _
    %412 = vsyncpa [#allocation5], 1
    %s413 = scalar_lea.sflag [#allocation5], 1
    %414 = vsyncpa %s413, 1
    %415 = vsyncpa [#allocation8], 1
    %s416 = scalar_lea.sflag [#allocation8], 1
    %417 = vsyncpa %s416, 1
    %418 = vsyncpa [#allocation6], 1
    %s419 = scalar_lea.sflag [#allocation6], 1
    %420 = vsyncpa %s419, 1

</llo_original>
